<compile_context>
chip_gen: v7x
topology: tpu7x:2x2x1
jax: 0.10.0
libtpu: 0.0.40
codegen_flags: <defaults>
</compile_context>

<pallas_src>
import functools

import jax
import jax.numpy as jnp
from jax import lax
from jax.experimental import pallas as pl
from jax.experimental.pallas import tpu as pltpu

_LANES = 128
_MAX_BLOCK_ROWS = 4096   # (4096,128) f32 = 2 MiB per pipeline buffer


def _mix_u32(idx_u32, seed_u32):
    """Stateless 32-bit mixer (lowbias32): uniform pseudo-random bits per element."""
    h = idx_u32 + seed_u32 * jnp.uint32(0x9E3779B1)
    h = h ^ (h >> 16)
    h = h * jnp.uint32(0x7FEB352D)
    h = h ^ (h >> 15)
    h = h * jnp.uint32(0x846CA68B)
    h = h ^ (h >> 16)
    return h


def _subsampled_mean_kernel(scalar_ref, x_ref, *rest, p, loss_factor,
                            block_rows, has_mask):
    if has_mask:
        m_ref, out_ref, acc_s, acc_c = rest
    else:
        out_ref, acc_s, acc_c = rest

    i = pl.program_id(0)
    nsteps = pl.num_programs(0)

    @pl.when(i == 0)
    def _():
        acc_s[...] = jnp.zeros_like(acc_s)
        acc_c[...] = jnp.zeros_like(acc_c)

    seed = scalar_ref[0]
    n = scalar_ref[1]          # true (unpadded) element count

    shape = (block_rows, _LANES)
    row_ids = lax.broadcasted_iota(jnp.int32, shape, 0) + i * block_rows
    lane_ids = lax.broadcasted_iota(jnp.int32, shape, 1)
    elem_ids = row_ids * _LANES + lane_ids          # global flat index

    bits = _mix_u32(elem_ids.astype(jnp.uint32), seed.astype(jnp.uint32))
    thresh = jnp.uint32(min(int(p * 4294967296.0), 4294967295))
    keep = (elem_ids < n) & (bits < thresh)          # tail/padding masked here
    if has_mask:
        keep = keep & (m_ref[...] != 0)

    xb = x_ref[...].astype(jnp.float32)
    contrib = jnp.where(keep, xb, jnp.float32(0.0))  # where() kills OOB garbage
    cnt = keep.astype(jnp.float32)

    if block_rows % 8 == 0:
        folds = block_rows // 8
        # fold (block_rows,128) -> (8,128): pure vector adds (VPU), no XLU
        acc_s[...] += contrib.reshape(folds, 8, _LANES).sum(axis=0)
        acc_c[...] += cnt.reshape(folds, 8, _LANES).sum(axis=0)
    else:
        # ragged single-block case (grid == 1 by construction)
        acc_s[0:1, :] += contrib.sum(axis=0, keepdims=True)
        acc_c[0:1, :] += cnt.sum(axis=0, keepdims=True)

    @pl.when(i == nsteps - 1)
    def _():
        total = jnp.sum(acc_s[...])
        count = jnp.sum(acc_c[...])
        # NaN on an empty selection — matches torch.masked_select(...).mean()
        out_ref[0, 0] = (total / count) * jnp.float32(loss_factor)


def masked_sample_and_scale(x, mask=None, *, subsample_rate=0.1,
                            loss_factor=1.0, seed=0):
    """JAX/Pallas equivalent of RolloutAuxTask.masked_sample_and_scale."""
    n = int(x.size)
    if n == 0:
        return jnp.float32(float("nan")) * jnp.float32(loss_factor)

    flat = x.reshape(-1)                       # keep native dtype (cast in-kernel)
    has_mask = mask is not None
    mflat = mask.reshape(-1).astype(jnp.int8) if has_mask else None

    pad = (-n) % _LANES
    if pad:
        # TODO(synk): only hit when numel % 128 != 0; tail is masked in-kernel.
        flat = jnp.pad(flat, (0, pad))
        if has_mask:
            mflat = jnp.pad(mflat, (0, pad))

    rows = (n + pad) // _LANES
    block_rows = rows if rows <= _MAX_BLOCK_ROWS else _MAX_BLOCK_ROWS
    grid = pl.cdiv(rows, block_rows)

    x2 = flat.reshape(rows, _LANES)
    inputs = [jnp.array([seed, n], jnp.int32), x2]
    in_specs = [pl.BlockSpec((block_rows, _LANES), lambda i, s: (i, 0))]
    if has_mask:
        inputs.append(mflat.reshape(rows, _LANES))
        in_specs.append(pl.BlockSpec((block_rows, _LANES), lambda i, s: (i, 0)))

    kernel = functools.partial(
        _subsampled_mean_kernel,
        p=float(subsample_rate),
        loss_factor=float(loss_factor),
        block_rows=block_rows,
        has_mask=has_mask)

    out = pl.pallas_call(
        kernel,
        out_shape=jax.ShapeDtypeStruct((1, 1), jnp.float32),
        grid_spec=pltpu.PrefetchScalarGridSpec(
            num_scalar_prefetch=1,                  # [seed, n] land in SMEM
            grid=(grid,),
            in_specs=in_specs,
            out_specs=pl.BlockSpec(memory_space=pltpu.MemorySpace.SMEM),
            scratch_shapes=[pltpu.VMEM((8, _LANES), jnp.float32),   # sum acc
                            pltpu.VMEM((8, _LANES), jnp.float32)],  # count acc
        ),
        compiler_params=pltpu.CompilerParams(
            dimension_semantics=("arbitrary",)),    # accumulation across grid
    )(*inputs)
    return out[0, 0]


def subsampled_mean(x, p=0.1, seed=0):
    """Pallas equivalent of the free function `subsampled_mean`."""
    return masked_sample_and_scale(x, None, subsample_rate=p,
                                   loss_factor=1.0, seed=seed)


class RolloutAuxTaskPallas:
    """Minimal port of the base class: holds cfg + the Pallas hot path."""

    def __init__(self, cfg=None, aux_cfg=None, task_cfg=None, device=None,
                 hidden_size=None, subsample_rate=0.1, loss_factor=1.0,
                 **kwargs):
        self.cfg = cfg
        self.aux_cfg = aux_cfg
        self.task_cfg = task_cfg
        self.device = device
        self.subsample_rate = subsample_rate
        self.loss_factor = loss_factor
        # TODO(synk): forward()/get_loss() are abstract in the PyTorch module
        # (no concrete compute); only masked_sample_and_scale is implemented.

    @staticmethod
    def get_required_sensors(*args):
        return []

    def masked_sample_and_scale(self, x, mask=None, seed=0):
        return masked_sample_and_scale(
            x, mask,
            subsample_rate=self.subsample_rate,
            loss_factor=self.loss_factor,
            seed=seed,
        )


def _reference(x, mask, p, loss_factor, seed):
    """Pure-JAX reference using the same hash-based keep decision."""
    flat = x.reshape(-1).astype(jnp.float32)
    ids = jnp.arange(flat.shape[0], dtype=jnp.uint32)
    bits = _mix_u32(ids, jnp.uint32(seed))
    thresh = jnp.uint32(min(int(p * 4294967296.0), 4294967295))
    keep = bits < thresh
    if mask is not None:
        keep = keep & mask.reshape(-1)
    s = jnp.sum(jnp.where(keep, flat, 0.0))
    c = jnp.sum(keep.astype(jnp.float32))
    return (s / c) * jnp.float32(loss_factor)


if __name__ == "__main__":
    key = jax.random.PRNGKey(0)
    # small synthetic "loss tensor" consistent with a rollout aux loss:
    # (batch=2, channels=4, spatial=16x16)
    x = jax.random.normal(key, (2, 4, 16, 16), dtype=jnp.float32)
    mask = x > 0.0   # optional boolean mask, as in masked_sample_and_scale

    task = RolloutAuxTaskPallas(subsample_rate=0.1, loss_factor=2.0)

    out_masked = task.masked_sample_and_scale(x, mask, seed=123)
    out_nomask = task.masked_sample_and_scale(x, None, seed=123)
    jax.block_until_ready((out_masked, out_nomask))

    ref_masked = _reference(x, mask, 0.1, 2.0, 123)
    ref_nomask = _reference(x, None, 0.1, 2.0, 123)

    assert out_masked.shape == () and out_nomask.shape == ()
    assert bool(jnp.isfinite(out_masked)) and bool(jnp.isfinite(out_nomask))
    assert jnp.allclose(out_masked, ref_masked, rtol=1e-4, atol=1e-5)
    assert jnp.allclose(out_nomask, ref_nomask, rtol=1e-4, atol=1e-5)
    print("KERNEL_OK")
</pallas_src>

<mosaic_0001>
module attributes {stable_mosaic.version = 11 : i64} {
  func.func @_subsampled_mean_kernel(%arg0: i32, %arg1: memref<2xi32, #tpu.memory_space<smem>>, %arg2: memref<16x128xf32, #tpu.memory_space<vmem>>, %arg3: memref<16x128xi8, #tpu.memory_space<vmem>>, %arg4: memref<1x1xf32, #tpu.memory_space<smem>>, %arg5: memref<8x128xf32, #tpu.memory_space<vmem>>, %arg6: memref<8x128xf32, #tpu.memory_space<vmem>>) attributes {dimension_semantics = [#tpu.dimension_semantics<arbitrary>], iteration_bounds = array<i64: 1>, scalar_prefetch = 1 : i64, scratch_operands = 2 : i64, tpu.core_type = #tpu.core_type<tc>, window_params = [{transform_indices = @transform_0, window_bounds = array<i64: 16, 128>}, {transform_indices = @transform_1, window_bounds = array<i64: 16, 128>}, {transform_indices = @transform_2, window_bounds = array<i64: 1, 1>}]} {
    %c0_i32 = arith.constant 0 : i32
    %0 = arith.cmpi eq, %arg0, %c0_i32 : i32
    %1 = arith.extui %0 : i1 to i32
    %c0_i32_0 = arith.constant 0 : i32
    %2 = arith.cmpi ne, %1, %c0_i32_0 : i32
    scf.if %2 {
      %cst_19 = arith.constant 0.000000e+00 : f32
      %56 = vector.broadcast %cst_19 : f32 to vector<8x128xf32>
      %c0_20 = arith.constant 0 : index
      %c0_21 = arith.constant 0 : index
      %57 = vector.load %arg5[%c0_20, %c0_21] : memref<8x128xf32, #tpu.memory_space<vmem>>, vector<8x128xf32>
      tpu.vector_store %arg5[%c0_20, %c0_21], %56 {strides = array<i32>} : memref<8x128xf32, #tpu.memory_space<vmem>>, vector<8x128xf32>,
      %cst_22 = arith.constant 0.000000e+00 : f32
      %58 = vector.broadcast %cst_22 : f32 to vector<8x128xf32>
      %c0_23 = arith.constant 0 : index
      %c0_24 = arith.constant 0 : index
      %59 = vector.load %arg6[%c0_23, %c0_24] : memref<8x128xf32, #tpu.memory_space<vmem>>, vector<8x128xf32>
      tpu.vector_store %arg6[%c0_23, %c0_24], %58 {strides = array<i32>} : memref<8x128xf32, #tpu.memory_space<vmem>>, vector<8x128xf32>,
    } else {
    }
    %c0 = arith.constant 0 : index
    %3 = memref.load %arg1[%c0] : memref<2xi32, #tpu.memory_space<smem>>
    %c1 = arith.constant 1 : index
    %4 = memref.load %arg1[%c1] : memref<2xi32, #tpu.memory_space<smem>>
    %5 = tpu.iota {dimensions = array<i32: 0>} : vector<16x128xi32>
    %c16_i32 = arith.constant 16 : i32
    %6 = arith.muli %arg0, %c16_i32 : i32
    %7 = vector.broadcast %6 : i32 to vector<16x128xi32>
    %8 = arith.addi %5, %7 : vector<16x128xi32>
    %9 = tpu.iota {dimensions = array<i32: 1>} : vector<16x128xi32>
    %c128_i32 = arith.constant 128 : i32
    %10 = vector.broadcast %c128_i32 : i32 to vector<16x128xi32>
    %11 = arith.muli %8, %10 : vector<16x128xi32>
    %12 = arith.addi %11, %9 : vector<16x128xi32>
    %c-1640531535_i32 = arith.constant -1640531535 : i32
    %13 = arith.muli %3, %c-1640531535_i32 : i32
    %14 = vector.broadcast %13 : i32 to vector<16x128xi32>
    %15 = arith.addi %12, %14 : vector<16x128xi32>
    %c16_i32_1 = arith.constant 16 : i32
    %16 = vector.broadcast %c16_i32_1 : i32 to vector<16x128xi32>
    %17 = arith.shrui %15, %16 : vector<16x128xi32>
    %18 = arith.xori %15, %17 : vector<16x128xi32>
    %c2146121005_i32 = arith.constant 2146121005 : i32
    %19 = vector.broadcast %c2146121005_i32 : i32 to vector<16x128xi32>
    %20 = arith.muli %18, %19 : vector<16x128xi32>
    %c15_i32 = arith.constant 15 : i32
    %21 = vector.broadcast %c15_i32 : i32 to vector<16x128xi32>
    %22 = arith.shrui %20, %21 : vector<16x128xi32>
    %23 = arith.xori %20, %22 : vector<16x128xi32>
    %c-2073254261_i32 = arith.constant -2073254261 : i32
    %24 = vector.broadcast %c-2073254261_i32 : i32 to vector<16x128xi32>
    %25 = arith.muli %23, %24 : vector<16x128xi32>
    %c16_i32_2 = arith.constant 16 : i32
    %26 = vector.broadcast %c16_i32_2 : i32 to vector<16x128xi32>
    %27 = arith.shrui %25, %26 : vector<16x128xi32>
    %28 = arith.xori %25, %27 : vector<16x128xi32>
    %29 = vector.broadcast %4 : i32 to vector<16x128xi32>
    %30 = arith.cmpi slt, %12, %29 : vector<16x128xi32>
    %c429496729_i32 = arith.constant 429496729 : i32
    %31 = vector.broadcast %c429496729_i32 : i32 to vector<16x128xi32>
    %32 = arith.cmpi ult, %28, %31 : vector<16x128xi32>
    %33 = arith.andi %30, %32 : vector<16x128xi1>
    %c0_3 = arith.constant 0 : index
    %c0_4 = arith.constant 0 : index
    %34 = vector.load %arg3[%c0_3, %c0_4] : memref<16x128xi8, #tpu.memory_space<vmem>>, vector<16x128xi8>
    %c0_i8 = arith.constant 0 : i8
    %35 = vector.broadcast %c0_i8 : i8 to vector<16x128xi8>
    %36 = arith.cmpi ne, %34, %35 : vector<16x128xi8>
    %37 = arith.andi %33, %36 : vector<16x128xi1>
    %c0_5 = arith.constant 0 : index
    %c0_6 = arith.constant 0 : index
    %38 = vector.load %arg2[%c0_5, %c0_6] : memref<16x128xf32, #tpu.memory_space<vmem>>, vector<16x128xf32>
    %cst = arith.constant 0.000000e+00 : f32
    %39 = vector.broadcast %cst : f32 to vector<16x128xf32>
    %40 = arith.select %37, %38, %39 : vector<16x128xi1>, vector<16x128xf32>
    %41 = arith.extui %37 : vector<16x128xi1> to vector<16x128xi32>
    %42 = arith.sitofp %41 : vector<16x128xi32> to vector<16x128xf32>
    %c0_7 = arith.constant 0 : index
    %c0_8 = arith.constant 0 : index
    %43 = vector.load %arg5[%c0_7, %c0_8] : memref<8x128xf32, #tpu.memory_space<vmem>>, vector<8x128xf32>
    %44 = vector.shape_cast %40 : vector<16x128xf32> to vector<2x8x128xf32>
    %cst_9 = arith.constant dense<0.000000e+00> : vector<8x128xf32>
    %45 = vector.multi_reduction <add>, %44, %cst_9 [0] : vector<2x8x128xf32> to vector<8x128xf32>
    %46 = arith.addf %43, %45 : vector<8x128xf32>
    %c0_10 = arith.constant 0 : index
    %c0_11 = arith.constant 0 : index
    %47 = vector.load %arg5[%c0_10, %c0_11] : memref<8x128xf32, #tpu.memory_space<vmem>>, vector<8x128xf32>
    tpu.vector_store %arg5[%c0_10, %c0_11], %46 {strides = array<i32>} : memref<8x128xf32, #tpu.memory_space<vmem>>, vector<8x128xf32>,
    %c0_12 = arith.constant 0 : index
    %c0_13 = arith.constant 0 : index
    %48 = vector.load %arg6[%c0_12, %c0_13] : memref<8x128xf32, #tpu.memory_space<vmem>>, vector<8x128xf32>
    %49 = vector.shape_cast %42 : vector<16x128xf32> to vector<2x8x128xf32>
    %cst_14 = arith.constant dense<0.000000e+00> : vector<8x128xf32>
    %50 = vector.multi_reduction <add>, %49, %cst_14 [0] : vector<2x8x128xf32> to vector<8x128xf32>
    %51 = arith.addf %48, %50 : vector<8x128xf32>
    %c0_15 = arith.constant 0 : index
    %c0_16 = arith.constant 0 : index
    %52 = vector.load %arg6[%c0_15, %c0_16] : memref<8x128xf32, #tpu.memory_space<vmem>>, vector<8x128xf32>
    tpu.vector_store %arg6[%c0_15, %c0_16], %51 {strides = array<i32>} : memref<8x128xf32, #tpu.memory_space<vmem>>, vector<8x128xf32>,
    %c0_i32_17 = arith.constant 0 : i32
    %53 = arith.cmpi eq, %arg0, %c0_i32_17 : i32
    %54 = arith.extui %53 : i1 to i32
    %c0_i32_18 = arith.constant 0 : i32
    %55 = arith.cmpi ne, %54, %c0_i32_18 : i32
    scf.if %55 {
      %c0_19 = arith.constant 0 : index
      %c0_20 = arith.constant 0 : index
      %56 = vector.load %arg5[%c0_19, %c0_20] : memref<8x128xf32, #tpu.memory_space<vmem>>, vector<8x128xf32>
      %57 = vector.shape_cast %56 : vector<8x128xf32> to vector<1x8x128xf32>
      %cst_21 = arith.constant dense<0.000000e+00> : vector<1xf32>
      %58 = vector.multi_reduction <add>, %57, %cst_21 [1, 2] : vector<1x8x128xf32> to vector<1xf32>
      %59 = vector.shape_cast %58 : vector<1xf32> to vector<1x1x1xf32>
      %60 = vector.extract %59[0, 0, 0] : f32 from vector<1x1x1xf32>
      %c0_22 = arith.constant 0 : index
      %c0_23 = arith.constant 0 : index
      %61 = vector.load %arg6[%c0_22, %c0_23] : memref<8x128xf32, #tpu.memory_space<vmem>>, vector<8x128xf32>
      %62 = vector.shape_cast %61 : vector<8x128xf32> to vector<1x8x128xf32>
      %cst_24 = arith.constant dense<0.000000e+00> : vector<1xf32>
      %63 = vector.multi_reduction <add>, %62, %cst_24 [1, 2] : vector<1x8x128xf32> to vector<1xf32>
      %64 = vector.shape_cast %63 : vector<1xf32> to vector<1x1x1xf32>
      %65 = vector.extract %64[0, 0, 0] : f32 from vector<1x1x1xf32>
      %66 = arith.divf %60, %65 : f32
      %cst_25 = arith.constant 2.000000e+00 : f32
      %67 = arith.mulf %66, %cst_25 : f32
      %c0_26 = arith.constant 0 : index
      %c0_27 = arith.constant 0 : index
      %68 = memref.load %arg4[%c0_26, %c0_27] : memref<1x1xf32, #tpu.memory_space<smem>>
      memref.store %67, %arg4[%c0_26, %c0_27] : memref<1x1xf32, #tpu.memory_space<smem>>
    } else {
    }
    return
  }
  func.func @transform_0(%arg0: i32, %arg1: memref<2xi32, #tpu.memory_space<smem>>) -> (i32, i32) {
    %c0_i32 = arith.constant 0 : i32
    %c0_i32_0 = arith.constant 0 : i32
    return %arg0, %c0_i32 : i32, i32
  }
  func.func @transform_1(%arg0: i32, %arg1: memref<2xi32, #tpu.memory_space<smem>>) -> (i32, i32) {
    %c0_i32 = arith.constant 0 : i32
    %c0_i32_0 = arith.constant 0 : i32
    return %arg0, %c0_i32 : i32, i32
  }
  func.func @transform_2(%arg0: i32, %arg1: memref<2xi32, #tpu.memory_space<smem>>) -> (i32, i32) {
    %c0_i32 = arith.constant 0 : i32
    %c0_i32_0 = arith.constant 0 : i32
    %c0_i32_1 = arith.constant 0 : i32
    return %c0_i32, %c0_i32_0 : i32, i32
  }
}

</mosaic_0001>

<llo_original>
// kernel: tpu_custom_call.1
$region0: #{tpu_custom_call.1}
  #allocation0 [shape = 'u32[]', space=smem, size = 0x4, offset = 0x4, fixed_abs, tag = 'smem constant byte address 0x4 - core index']
  #allocation1 [shape = 'u32[144,128]{1,0:T(1,128)}', space=vmem, size = 0x12000, scoped, tag = 'internal scratch']
  #allocation2 [shape = 'f32[8,128]{1,0:T(8,128)}', space=vmem, size = 0x1000, scoped, tag = 'scratch operand']
  #allocation3 [shape = 'f32[8,128]{1,0:T(8,128)}', space=vmem, size = 0x1000, scoped, tag = 'scratch operand']
  #allocation4 [shape = 's32[1]{0}', space=sflag, size = 0x4, scoped, tag = 'scoped memory for tpu_custom_call.1']
  #allocation5 [shape = 'u8[512]{0}', space=smem, size = 0x200, scoped, tag = 'prefetched SMEM operand 0']
  %s0 = inlined_call_operand.hbm [shape: s32[2], index: 0, kind: input, shape index: {}]
  %s1 = inlined_call_operand.hbm [shape: f32[16,128], index: 1, kind: input, shape index: {}]
  %s2 = inlined_call_operand.vmem [shape: s8[16,128], index: 2, kind: input, shape index: {}]
  %s3 = inlined_call_operand.hbm [shape: f32[1,1], index: 3, kind: output, shape index: {}]
  %s4 = sld [smem:[#allocation0]]
  $region30: #{tpu_custom_call.1} parent=0
    _
  %s6 = ssub.s32 1, %s4
  %s7 = scalar_select 0, %s6, %s4
  %9 = dma.hbm_to_smem %s0, 16, [#allocation5], [#allocation4]
  %10 = dma.done [#allocation4], 16
  %11 = sfence
  $region1: #{tpu_custom_call.1} parent=0
    #allocation6 [shape = 'u8[8192]{0}', space=vmem, size = 0x2000, scoped, tag = 'input window, operand 1, single buffered']
    #allocation7 [shape = 's32[1]{0}', space=sflag, size = 0x4, scoped, tag = 'scoped memory for tpu_custom_call.1']
    #allocation8 [shape = 's32[1]{0}', space=sflag, size = 0x4, scoped, tag = 'scoped memory for tpu_custom_call.1']
    #allocation9 [shape = 'u8[512]{0}', space=smem, size = 0x200, scoped, tag = 'output window, operand 0, single buffered']
    %12 = vsyncpa [#allocation7], 0
    %13 = vsyncpa [#allocation8], 0
    // Predicated region
    $region2: #{tpu_custom_call.1} parent=1 // pred_check
      _
    $region3: #{tpu_custom_call.1} parent=1 // pred_check_branch
      %15 = sbr.rel (0) target = $region5
    $region4: #{tpu_custom_call.1} parent=1 // pred_region
      %s17 = ssub.s32 256, 256
      %18 = vsyncadd [#allocation7], %s17
      %s19 = sshll.u32 [#allocation6], 4
      %s20 = int_to_ptr.vmem [resolvable:$true] %s19
      %25 = dma.hbm_to_vmem [thread:$0]  %s1, 256, %s20, [#allocation7], 128, 128, 8
    $region5: #{tpu_custom_call.1} parent=1 // pred_fallthru
      _
    // Predicated region
    $region6: #{tpu_custom_call.1} parent=1 // pred_check
      _
    $region7: #{tpu_custom_call.1} parent=1 // pred_check_branch
      %27 = sbr.rel (0) target = $region9
    $region8: #{tpu_custom_call.1} parent=1 // pred_region
      _
    $region9: #{tpu_custom_call.1} parent=1 // pred_fallthru
      _
    // Predicated region
    $region10: #{tpu_custom_call.1} parent=1 // pred_check
      _
    $region11: #{tpu_custom_call.1} parent=1 // pred_check_branch
      %29 = sbr.rel (0) target = $region13
    $region12: #{tpu_custom_call.1} parent=1 // pred_region
      %30 = dma.done [#allocation7], 256
    $region13: #{tpu_custom_call.1} parent=1 // pred_fallthru
      _
    %p33 = scmp.eq.s32.totalorder 0, 0
    // Predicated region
    $region14: #{tpu_custom_call.1} parent=1 // pred_check
      %p34 = pneg %p33
    $region15: #{tpu_custom_call.1} parent=1 // pred_check_branch
      %36 = sbr.rel (%p34) target = $region17
    $region16: #{tpu_custom_call.1} parent=1 // pred_region
      %37 = vst [vmem:[#allocation2] sm:$0xff] 0.0
      %38 = vst [vmem:[#allocation3] sm:$0xff] 0.0
    $region17: #{tpu_custom_call.1} parent=1 // pred_fallthru
      _
    %s39 = sld [smem:[#allocation5]]
    %s40 = sld [smem:[#allocation5 + $0x1]]
    %v41 = vlaneseq
    %v42 = vshrl.u32 %v41, 7
    %v43 = vadd.s32 %v42, 8
    %s44 = smul.u32 0, 16
    %v45 = vstv %s44
    %v46 = vadd.s32 %v42, %v45
    %v47 = vadd.s32 %v43, %v45
    %v48 = vlaneseq
    %v49 = vand.u32 %v48, 127
    %v50 = vmul.u32 %v46, 128
    %v51 = vmul.u32 %v47, 128
    %v52 = vadd.s32 %v50, %v49
    %v53 = vadd.s32 %v51, %v49
    %s54 = smul.u32 %s39, 2654435761
    %v55 = vstv %s54
    %v56 = vadd.s32 %v52, %v55
    %v57 = vadd.s32 %v53, %v55
    %v58 = vshrl.u32 %v56, 16
    %v59 = vshrl.u32 %v57, 16
    %v60 = vxor.u32 %v56, %v58
    %v61 = vxor.u32 %v57, %v59
    %v62 = vmul.u32 %v60, 2146121005
    %v63 = vmul.u32 %v61, 2146121005
    %v64 = vshrl.u32 %v62, 15
    %v65 = vshrl.u32 %v63, 15
    %v66 = vxor.u32 %v62, %v64
    %v67 = vxor.u32 %v63, %v65
    %v68 = vmul.u32 %v66, 2221713035
    %v69 = vmul.u32 %v67, 2221713035
    %v70 = vshrl.u32 %v68, 16
    %v71 = vshrl.u32 %v69, 16
    %v72 = vxor.u32 %v68, %v70
    %v73 = vxor.u32 %v69, %v71
    %v74 = vstv %s40
    %vm75 = vcmp.lt.s32.totalorder %v52, %v74
    %vm76 = vcmp.lt.s32.totalorder %v53, %v74
    %vm77 = vcmp.lt.u32.totalorder %v72, 429496729
    %vm78 = vcmp.lt.u32.totalorder %v73, 429496729
    %vm79 = vmand %vm75, %vm77
    %vm80 = vmand %vm76, %vm78
    %v81 = vld [vmem:[%s2] sm:$0x3]
    %v82 = vld [vmem:[%s2 + $0x2] sm:$0x3]
    %vm83 = vnez %v81
    %vm84 = vnez %v82
    %v85 = vsel %vm83, 16843009, 0
    %v86 = vsel %vm84, 16843009, 0
    %v87 = vunpack.c.0.s8 %v85
    %v88 = vunpack.c.0.s8 %v86
    %vm89 = vcmp.ne.s32.totalorder %v87, 0
    %vm90 = vcmp.ne.s32.totalorder %v88, 0
    %vm91 = vmand %vm79, %vm89
    %vm92 = vmand %vm80, %vm90
    %v93 = vld [vmem:[#allocation6] sm:$0xff]
    %v94 = vld [vmem:[#allocation6 + $0x8] sm:$0xff]
    %v95 = vsel %vm91, %v93, 0.0
    %v96 = vsel %vm92, %v94, 0.0
    %v97 = vsel %vm91, 1, 0
    %v98 = vsel %vm92, 1, 0
    %v99 = vcvt.s32.f32 %v97
    %v100 = vcvt.s32.f32 %v98
    %v101 = vld [vmem:[#allocation2] sm:$0xff]
    %v102 = vadd.f32 %v95, %v96
    %v103 = vadd.f32 %v101, %v102
    %104 = vst [vmem:[#allocation2] sm:$0xff] %v103
    %v105 = vld [vmem:[#allocation3] sm:$0xff]
    %v106 = vadd.f32 %v99, %v100
    %v107 = vadd.f32 %v105, %v106
    %108 = vst [vmem:[#allocation3] sm:$0xff] %v107
    // Predicated region
    $region18: #{tpu_custom_call.1} parent=1 // pred_check
      %p109 = pneg %p33
    $region19: #{tpu_custom_call.1} parent=1 // pred_check_branch
      %111 = sbr.rel (%p109) target = $region21
    $region20: #{tpu_custom_call.1} parent=1 // pred_region
      %v112 = vld [vmem:[#allocation2] sm:$0xff]
      %113 = vadd.xlane.f32.xlu0 %v112
      %v114 = vpop.xlane.xlu0 %113
      %v115 = vrot.slane %v114, 4
      %v116 = vadd.f32 %v114, %v115
      %v117 = vrot.slane %v116, 2
      %v118 = vadd.f32 %v116, %v117
      %v119 = vrot.slane %v118, 1
      %v120 = vadd.f32 %v118, %v119
      %s121 = vtos %v120
      %v122 = vld [vmem:[#allocation3] sm:$0xff]
      %123 = vadd.xlane.f32.xlu0 %v122
      %v124 = vpop.xlane.xlu0 %123
      %v125 = vrot.slane %v124, 4
      %v126 = vadd.f32 %v124, %v125
      %v127 = vrot.slane %v126, 2
      %v128 = vadd.f32 %v126, %v127
      %v129 = vrot.slane %v128, 1
      %v130 = vadd.f32 %v128, %v129
      %s131 = vtos %v130
      %v132 = vstv %s131
      %v133 = vrcp.pop %v132
      %s134 = vtos %v133
      %s135 = smul.f32 %s121, %s134
      %s136 = smul.f32 %s135, 2.0
      %s137 = scalar_lea.smem [#allocation9], 0
      %138 = sst [smem:[%s137]] %s136
    $region21: #{tpu_custom_call.1} parent=1 // pred_fallthru
      _
    // Predicated region
    $region22: #{tpu_custom_call.1} parent=1 // pred_check
      _
    $region23: #{tpu_custom_call.1} parent=1 // pred_check_branch
      %140 = sbr.rel (0) target = $region25
    $region24: #{tpu_custom_call.1} parent=1 // pred_region
      %s142 = ssub.s32 16, 16
      %143 = vsyncadd [#allocation8], %s142
      %146 = dma.smem_to_hbm [#allocation9], 16, %s3, [#allocation8]
    $region25: #{tpu_custom_call.1} parent=1 // pred_fallthru
      _
    // Predicated region
    $region26: #{tpu_custom_call.1} parent=1 // pred_check
      _
    $region27: #{tpu_custom_call.1} parent=1 // pred_check_branch
      %148 = sbr.rel (0) target = $region29
    $region28: #{tpu_custom_call.1} parent=1 // pred_region
      %149 = dma.done [#allocation8], 16
    $region29: #{tpu_custom_call.1} parent=1 // pred_fallthru
      _
    %150 = sfence
    %151 = vsyncpa [#allocation7], 1
    %152 = vsyncpa [#allocation8], 1

</llo_original>
